<compile_context>
chip_gen: v7x
topology: tpu7x:2x2x1
jax: 0.10.0
libtpu: 0.0.40
codegen_flags: <defaults>
</compile_context>

<pallas_src>
import functools

import numpy as np
import jax
import jax.numpy as jnp
from jax import lax
from jax.experimental import pallas as pl
from jax.experimental.pallas import tpu as pltpu

TEMPERATURE = 0.07


def _round_up(x, m):
    return ((x + m - 1) // m) * m


# -----------------------------------------------------------------------------
# Fused Pallas kernel: patch-embed -> pooling -> projections -> CLIP head.
# Everything is tiny (<500 KiB) and lives in VMEM for the whole call; all dots
# are single-pass bf16 operands with f32 accumulation.
# -----------------------------------------------------------------------------
def _medclip_fused_kernel(
    # inputs
    patches_ref,     # [B*N, C*P*P] bf16
    w_patch_ref,     # [C*P*P, D]   bf16
    w_proj_ref,      # [D, 3D]      bf16  (w_vproj | w_tproj | w_tproj_bert)
    table_ref,       # [2V, D]      bf16  (embed ; embed_bert)
    aux_ref,         # [8, D]       f32   row0: b_patch; rows 1:1+B: cls pool;
                     #                    rows 1+B:1+2B: comb_txt; 1+2B:1+3B: comb_bert
    # output
    out_ref,         # [R, D] f32 slab: rows 0:B*N patch_emb | B*N:B*N+B cls |
                     #                  B*N+B:B*N+2B cols 0:2B = [v2t | v2t_bert]
    *, batch, n_patches, dim, vocab, temperature):
    B, N, D, V = batch, n_patches, dim, vocab
    f32, bf16 = jnp.float32, jnp.bfloat16
    r_cls = B * N
    r_log = B * N + B

    out_ref[...] = jnp.zeros_like(out_ref)  # keep padding rows/lanes defined

    # ---- patch embedding ("conv" as matmul), bias folded in ------------------
    patch_emb = jnp.dot(patches_ref[...], w_patch_ref[...],
                        preferred_element_type=f32) + aux_ref[0:1, :]
    out_ref[0:r_cls, :] = patch_emb                                    # [B*N, D]

    # ---- cls token: per-image mean over patches via constant pooling matmul --
    pool = aux_ref[1:1 + B, 0:B * N].astype(bf16)                      # [B, B*N]
    cls = jnp.dot(pool, patch_emb.astype(bf16), preferred_element_type=f32)
    out_ref[r_cls:r_cls + B, :] = cls                                  # [B, D]

    # ---- text towers: gather + masked-mean folded into comb @ table ----------
    comb_t = aux_ref[1 + B:1 + 2 * B, 0:V].astype(bf16)                # [B, V]
    comb_b = aux_ref[1 + 2 * B:1 + 3 * B, 0:V].astype(bf16)            # [B, V]
    pooled_t = jnp.dot(comb_t, table_ref[0:V, :], preferred_element_type=f32)
    pooled_b = jnp.dot(comb_b, table_ref[V:2 * V, :], preferred_element_type=f32)

    # ---- three projections, straight from values (no scratch round trip) -----
    vfeat = jnp.dot(cls.astype(bf16), w_proj_ref[:, 0:D],
                    preferred_element_type=f32)                        # visual
    tfeat = jnp.dot(pooled_t.astype(bf16), w_proj_ref[:, D:2 * D],
                    preferred_element_type=f32)                        # text
    bfeat = jnp.dot(pooled_b.astype(bf16), w_proj_ref[:, 2 * D:3 * D],
                    preferred_element_type=f32)                        # text-bert

    # ---- contrastive head: rsqrt L2-normalize, temperature-scaled logits -----
    def l2_normalize(x):
        ss = jnp.sum(x * x, axis=-1, keepdims=True)
        # x * rsqrt(max(||x||^2, eps^2)) == x / max(||x||, eps), eps = 1e-12
        return x * lax.rsqrt(jnp.maximum(ss, f32(1e-24)))

    v = l2_normalize(vfeat)
    t = l2_normalize(tfeat)
    tb = l2_normalize(bfeat)

    inv_temp = f32(1.0 / temperature)
    dn = (((1,), (1,)), ((), ()))   # contract last dims: transpose-free
    v2t = lax.dot_general(v.astype(bf16), t.astype(bf16), dn,
                          preferred_element_type=f32) * inv_temp
    v2tb = lax.dot_general(v.astype(bf16), tb.astype(bf16), dn,
                           preferred_element_type=f32) * inv_temp
    out_ref[r_log:r_log + B, 0:B] = v2t
    out_ref[r_log:r_log + B, B:2 * B] = v2tb
    # t2v / t2v_bert are exact transposes and are taken in the wrapper.


# -----------------------------------------------------------------------------
# MedCLIPModel.forward
# -----------------------------------------------------------------------------
def _comb_matrix(ids, masks, vocab):
    # masked mean of gathered embedding rows is linear in the table:
    #   pooled[b] = (sum_s m[b,s]*onehot(ids[b,s])) @ table / max(sum_s m, 1)
    m = masks.astype(jnp.float32)                                   # [B, S]
    onehot = jax.nn.one_hot(ids, vocab, dtype=jnp.float32)          # [B, S, V]
    num = jnp.einsum("bs,bsv->bv", m, onehot)                       # [B, V]
    den = jnp.maximum(jnp.sum(m, axis=1, keepdims=True), 1.0)       # [B, 1]
    return num / den


def medclip_forward(params, images, reports_ids, reports_masks,
                    reports_ids_bert, reports_masks_bert):
    vis, txt = params["visual"], params["text"]
    B, C, H, W = images.shape
    P = vis["patch_size"]
    D = vis["w_patch"].shape[1]
    vocab = txt["embed"].shape[0]
    nh, nw = H // P, W // P
    N = nh * nw
    assert B * N <= D and vocab <= D, "aux packing assumes tiny B*N / vocab"

    # TODO(synk): the NCHW patchify transpose stays as trace-time XLA layout
    # glue; there is no clean in-kernel Pallas equivalent at this layout/size.
    patches = images.reshape(B, C, nh, P, nw, P)
    patches = patches.transpose(0, 2, 4, 1, 3, 5).reshape(B * N, C * P * P)
    patches = patches.astype(jnp.bfloat16)

    # Weight operands as bf16 (params are jit constants -> casts are folded).
    w_patch = vis["w_patch"].astype(jnp.bfloat16)                        # [K, D]
    w_proj = jnp.concatenate(
        [vis["w_vproj"], txt["w_tproj"], txt["w_tproj_bert"]],
        axis=1).astype(jnp.bfloat16)                                     # [D, 3D]
    table = jnp.concatenate(
        [txt["embed"], txt["embed_bert"]], axis=0).astype(jnp.bfloat16)  # [2V, D]

    # Tiny operands consolidated into ONE aux VMEM buffer (1 DMA instead of 4).
    pool_cls = jnp.asarray(np.kron(np.eye(B, dtype=np.float32),
                                   np.full((1, N), 1.0 / N, np.float32)))
    comb_txt = _comb_matrix(reports_ids, reports_masks, vocab)           # [B, V]
    comb_bert = _comb_matrix(reports_ids_bert, reports_masks_bert, vocab)
    aux_rows = _round_up(1 + 3 * B, 8)
    aux = jnp.zeros((aux_rows, D), jnp.float32)
    aux = aux.at[0, :].set(vis["b_patch"])                # constant (folded)
    aux = aux.at[1:1 + B, :B * N].set(pool_cls)           # constant (folded)
    aux = aux.at[1 + B:1 + 2 * B, :vocab].set(comb_txt)   # runtime, tiny
    aux = aux.at[1 + 2 * B:1 + 3 * B, :vocab].set(comb_bert)

    out_rows = _round_up(B * N + 2 * B, 8)
    vmem = pl.BlockSpec(memory_space=pltpu.MemorySpace.VMEM)
    kernel = functools.partial(_medclip_fused_kernel, batch=B, n_patches=N,
                               dim=D, vocab=vocab, temperature=TEMPERATURE)

    # Grid-less call: whole (tiny) operands resident in VMEM, one output slab.
    # TODO(synk): at production batch sizes add a grid over B with
    # dimension_semantics=("parallel",) so both v7x TensorCores are used.
    slab = pl.pallas_call(
        kernel,
        out_shape=jax.ShapeDtypeStruct((out_rows, D), jnp.float32),
        in_specs=[vmem] * 5,
        out_specs=vmem,
    )(patches, w_patch, w_proj, table, aux)

    patch_embeddings = slab[:B * N, :].reshape(B, N, D)
    cls_token = slab[B * N:B * N + B, :]
    logit_rows = slab[B * N + B:B * N + 2 * B, :2 * B]
    logits_v2t = logit_rows[:, :B]
    logits_v2t_bert = logit_rows[:, B:2 * B]
    return {
        "logits_v2t": logits_v2t,
        "logits_t2v": logits_v2t.T,
        "logits_v2t_bert": logits_v2t_bert,
        "logits_t2v_bert": logits_v2t_bert.T,
        "patch_embeddings": patch_embeddings,
        "cls_token": cls_token,
    }


# -----------------------------------------------------------------------------
# Pure-JAX reference (mirrors the PyTorch forward; HIGHEST-precision matmuls).
# -----------------------------------------------------------------------------
def medclip_forward_ref(params, images, reports_ids, reports_masks,
                        reports_ids_bert, reports_masks_bert):
    vis, txt = params["visual"], params["text"]
    hp = functools.partial(jnp.dot, precision=lax.Precision.HIGHEST)
    B, C, H, W = images.shape
    P = vis["patch_size"]
    D = vis["w_patch"].shape[1]
    nh, nw = H // P, W // P
    N = nh * nw

    patches = images.reshape(B, C, nh, P, nw, P)
    patches = patches.transpose(0, 2, 4, 1, 3, 5).reshape(B * N, C * P * P)
    patch_emb = (hp(patches, vis["w_patch"]) + vis["b_patch"]).reshape(B, N, D)
    cls_token = jnp.mean(patch_emb, axis=1)
    visual_features = hp(cls_token, vis["w_vproj"])

    def pooled(table, ids, masks):
        emb = jnp.take(table, ids, axis=0)
        m = masks.astype(jnp.float32)[..., None]
        return jnp.sum(emb * m, axis=1) / jnp.maximum(jnp.sum(m, axis=1), 1.0)

    text_features = hp(pooled(txt["embed"], reports_ids, reports_masks),
                       txt["w_tproj"])
    text_features_bert = hp(pooled(txt["embed_bert"], reports_ids_bert,
                                   reports_masks_bert), txt["w_tproj_bert"])

    def norm(x):
        n = jnp.sqrt(jnp.sum(x * x, axis=-1, keepdims=True))
        return x / jnp.maximum(n, 1e-12)

    v, t, tb = norm(visual_features), norm(text_features), norm(text_features_bert)
    v2t = hp(v, t.T) / TEMPERATURE
    v2tb = hp(v, tb.T) / TEMPERATURE
    return {"logits_v2t": v2t, "logits_t2v": v2t.T,
            "logits_v2t_bert": v2tb, "logits_t2v_bert": v2tb.T,
            "patch_embeddings": patch_emb, "cls_token": cls_token}


def init_params(key, *, C=4, P=8, D=128, vocab=32):
    ks = jax.random.split(key, 7)
    scale = 0.02
    return {
        "visual": {
            "patch_size": P,
            "w_patch": scale * jax.random.normal(ks[0], (C * P * P, D), jnp.float32),
            "b_patch": scale * jax.random.normal(ks[1], (D,), jnp.float32),
            "w_vproj": scale * jax.random.normal(ks[2], (D, D), jnp.float32),
        },
        "text": {
            "embed": scale * jax.random.normal(ks[3], (vocab, D), jnp.float32),
            "embed_bert": scale * jax.random.normal(ks[4], (vocab, D), jnp.float32),
            "w_tproj": scale * jax.random.normal(ks[5], (D, D), jnp.float32),
            "w_tproj_bert": scale * jax.random.normal(ks[6], (D, D), jnp.float32),
        },
    }


if __name__ == "__main__":
    key = jax.random.PRNGKey(0)
    k_img, k_ids, k_idsb, k_params = jax.random.split(key, 4)

    B, C, H, W = 2, 4, 16, 16   # NCHW, like the PyTorch module
    P, D = 8, 128
    S, vocab = 8, 32
    N = (H // P) * (W // P)

    images = jax.random.normal(k_img, (B, C, H, W), jnp.float32)
    reports_ids = jax.random.randint(k_ids, (B, S), 0, vocab, jnp.int32)
    reports_masks = jnp.ones((B, S), jnp.float32).at[:, S - 2:].set(0.0)
    reports_ids_bert = jax.random.randint(k_idsb, (B, S), 0, vocab, jnp.int32)
    reports_masks_bert = jnp.ones((B, S), jnp.float32).at[:, S - 1:].set(0.0)

    params = init_params(k_params, C=C, P=P, D=D, vocab=vocab)

    fwd = jax.jit(functools.partial(medclip_forward, params))
    out = jax.block_until_ready(
        fwd(images, reports_ids, reports_masks, reports_ids_bert, reports_masks_bert))

    ref = jax.block_until_ready(
        jax.jit(functools.partial(medclip_forward_ref, params))(
            images, reports_ids, reports_masks, reports_ids_bert, reports_masks_bert))

    # Shape / semantics checks.
    assert out["logits_v2t"].shape == (B, B)
    assert out["logits_t2v"].shape == (B, B)
    assert out["logits_v2t_bert"].shape == (B, B)
    assert out["logits_t2v_bert"].shape == (B, B)
    assert out["patch_embeddings"].shape == (B, N, D)
    assert out["cls_token"].shape == (B, D)
    assert all(bool(jnp.all(jnp.isfinite(out[k]))) for k in out)
    assert bool(jnp.allclose(out["logits_t2v"], out["logits_v2t"].T, atol=1e-6))
    assert bool(jnp.allclose(out["logits_t2v_bert"], out["logits_v2t_bert"].T, atol=1e-6))

    # Numerical check against the HIGHEST-precision f32 reference of the
    # PyTorch forward.  The kernel runs single-pass bf16-in/f32-acc matmuls,
    # so tolerances are set for bf16 operand rounding.
    tols = {"patch_embeddings": (5e-3, 1e-2), "cls_token": (5e-3, 1e-2),
            "logits_v2t": (5e-2, 2e-2), "logits_t2v": (5e-2, 2e-2),
            "logits_v2t_bert": (5e-2, 2e-2), "logits_t2v_bert": (5e-2, 2e-2)}
    for name, (atol, rtol) in tols.items():
        assert bool(jnp.allclose(out[name], ref[name], atol=atol, rtol=rtol)), name

    print("KERNEL_OK")
</pallas_src>

<mosaic_0001>
module attributes {stable_mosaic.version = 11 : i64} {
  func.func @_medclip_fused_kernel(%arg0: memref<8x256xbf16, #tpu.memory_space<vmem>>, %arg1: memref<256x128xbf16, #tpu.memory_space<vmem>>, %arg2: memref<128x384xbf16, #tpu.memory_space<vmem>>, %arg3: memref<64x128xbf16, #tpu.memory_space<vmem>>, %arg4: memref<8x128xf32, #tpu.memory_space<vmem>>, %arg5: memref<16x128xf32, #tpu.memory_space<vmem>>) attributes {dimension_semantics = [], scalar_prefetch = 0 : i64, scratch_operands = 0 : i64, tpu.core_type = #tpu.core_type<tc>} {
    %cst = arith.constant 0.000000e+00 : f32
    %0 = vector.broadcast %cst : f32 to vector<16x128xf32>
    %c0 = arith.constant 0 : index
    %c0_0 = arith.constant 0 : index
    %1 = vector.load %arg5[%c0, %c0_0] : memref<16x128xf32, #tpu.memory_space<vmem>>, vector<16x128xf32>
    tpu.vector_store %arg5[%c0, %c0_0], %0 {strides = array<i32>} : memref<16x128xf32, #tpu.memory_space<vmem>>, vector<16x128xf32>,
    %c0_1 = arith.constant 0 : index
    %c0_2 = arith.constant 0 : index
    %2 = vector.load %arg0[%c0_1, %c0_2] : memref<8x256xbf16, #tpu.memory_space<vmem>>, vector<8x256xbf16>
    %c0_3 = arith.constant 0 : index
    %c0_4 = arith.constant 0 : index
    %3 = vector.load %arg1[%c0_3, %c0_4] : memref<256x128xbf16, #tpu.memory_space<vmem>>, vector<256x128xbf16>
    %cst_5 = arith.constant dense<0.000000e+00> : vector<8x128xf32>
    %4 = tpu.matmul %2, %3, %cst_5 {dimension_numbers = #tpu.dot_dimension_numbers<[1], [0], [0], [1], [0, 0, 1, 1], [], []>} : vector<8x256xbf16>, vector<256x128xbf16>, vector<8x128xf32> -> vector<8x128xf32>
    %c0_6 = arith.constant 0 : index
    %c0_7 = arith.constant 0 : index
    %5 = vector.load %arg4[%c0_6, %c0_7] : memref<8x128xf32, #tpu.memory_space<vmem>>, vector<1x128xf32>
    %6 = vector.broadcast %5 : vector<1x128xf32> to vector<8x128xf32>
    %7 = arith.addf %4, %6 : vector<8x128xf32>
    %c0_8 = arith.constant 0 : index
    %c0_9 = arith.constant 0 : index
    %8 = vector.load %arg5[%c0_8, %c0_9] : memref<16x128xf32, #tpu.memory_space<vmem>>, vector<8x128xf32>
    tpu.vector_store %arg5[%c0_8, %c0_9], %7 {strides = array<i32>} : memref<16x128xf32, #tpu.memory_space<vmem>>, vector<8x128xf32>,
    %c1 = arith.constant 1 : index
    %c0_10 = arith.constant 0 : index
    %9 = vector.load %arg4[%c1, %c0_10] : memref<8x128xf32, #tpu.memory_space<vmem>>, vector<2x8xf32>
    %10 = arith.truncf %9 : vector<2x8xf32> to vector<2x8xbf16>
    %11 = arith.truncf %7 : vector<8x128xf32> to vector<8x128xbf16>
    %cst_11 = arith.constant dense<0.000000e+00> : vector<2x128xf32>
    %12 = tpu.matmul %10, %11, %cst_11 {dimension_numbers = #tpu.dot_dimension_numbers<[1], [0], [0], [1], [0, 0, 1, 1], [], []>} : vector<2x8xbf16>, vector<8x128xbf16>, vector<2x128xf32> -> vector<2x128xf32>
    %c8 = arith.constant 8 : index
    %c0_12 = arith.constant 0 : index
    %13 = vector.load %arg5[%c8, %c0_12] : memref<16x128xf32, #tpu.memory_space<vmem>>, vector<2x128xf32>
    tpu.vector_store %arg5[%c8, %c0_12], %12 {strides = array<i32>} : memref<16x128xf32, #tpu.memory_space<vmem>>, vector<2x128xf32>,
    %c3 = arith.constant 3 : index
    %c0_13 = arith.constant 0 : index
    %14 = vector.load %arg4[%c3, %c0_13] : memref<8x128xf32, #tpu.memory_space<vmem>>, vector<2x32xf32>
    %15 = arith.truncf %14 : vector<2x32xf32> to vector<2x32xbf16>
    %c5 = arith.constant 5 : index
    %c0_14 = arith.constant 0 : index
    %16 = vector.load %arg4[%c5, %c0_14] : memref<8x128xf32, #tpu.memory_space<vmem>>, vector<2x32xf32>
    %17 = arith.truncf %16 : vector<2x32xf32> to vector<2x32xbf16>
    %c0_15 = arith.constant 0 : index
    %c0_16 = arith.constant 0 : index
    %18 = vector.load %arg3[%c0_15, %c0_16] : memref<64x128xbf16, #tpu.memory_space<vmem>>, vector<32x128xbf16>
    %cst_17 = arith.constant dense<0.000000e+00> : vector<2x128xf32>
    %19 = tpu.matmul %15, %18, %cst_17 {dimension_numbers = #tpu.dot_dimension_numbers<[1], [0], [0], [1], [0, 0, 1, 1], [], []>} : vector<2x32xbf16>, vector<32x128xbf16>, vector<2x128xf32> -> vector<2x128xf32>
    %c32 = arith.constant 32 : index
    %c0_18 = arith.constant 0 : index
    %20 = vector.load %arg3[%c32, %c0_18] : memref<64x128xbf16, #tpu.memory_space<vmem>>, vector<32x128xbf16>
    %cst_19 = arith.constant dense<0.000000e+00> : vector<2x128xf32>
    %21 = tpu.matmul %17, %20, %cst_19 {dimension_numbers = #tpu.dot_dimension_numbers<[1], [0], [0], [1], [0, 0, 1, 1], [], []>} : vector<2x32xbf16>, vector<32x128xbf16>, vector<2x128xf32> -> vector<2x128xf32>
    %22 = arith.truncf %12 : vector<2x128xf32> to vector<2x128xbf16>
    %c0_20 = arith.constant 0 : index
    %c0_21 = arith.constant 0 : index
    %23 = vector.load %arg2[%c0_20, %c0_21] : memref<128x384xbf16, #tpu.memory_space<vmem>>, vector<128x128xbf16>
    %cst_22 = arith.constant dense<0.000000e+00> : vector<2x128xf32>
    %24 = tpu.matmul %22, %23, %cst_22 {dimension_numbers = #tpu.dot_dimension_numbers<[1], [0], [0], [1], [0, 0, 1, 1], [], []>} : vector<2x128xbf16>, vector<128x128xbf16>, vector<2x128xf32> -> vector<2x128xf32>
    %25 = arith.truncf %19 : vector<2x128xf32> to vector<2x128xbf16>
    %c0_23 = arith.constant 0 : index
    %c128 = arith.constant 128 : index
    %26 = vector.load %arg2[%c0_23, %c128] : memref<128x384xbf16, #tpu.memory_space<vmem>>, vector<128x128xbf16>
    %cst_24 = arith.constant dense<0.000000e+00> : vector<2x128xf32>
    %27 = tpu.matmul %25, %26, %cst_24 {dimension_numbers = #tpu.dot_dimension_numbers<[1], [0], [0], [1], [0, 0, 1, 1], [], []>} : vector<2x128xbf16>, vector<128x128xbf16>, vector<2x128xf32> -> vector<2x128xf32>
    %28 = arith.truncf %21 : vector<2x128xf32> to vector<2x128xbf16>
    %c0_25 = arith.constant 0 : index
    %c256 = arith.constant 256 : index
    %29 = vector.load %arg2[%c0_25, %c256] : memref<128x384xbf16, #tpu.memory_space<vmem>>, vector<128x128xbf16>
    %cst_26 = arith.constant dense<0.000000e+00> : vector<2x128xf32>
    %30 = tpu.matmul %28, %29, %cst_26 {dimension_numbers = #tpu.dot_dimension_numbers<[1], [0], [0], [1], [0, 0, 1, 1], [], []>} : vector<2x128xbf16>, vector<128x128xbf16>, vector<2x128xf32> -> vector<2x128xf32>
    %31 = arith.mulf %24, %24 : vector<2x128xf32>
    %cst_27 = arith.constant dense<0.000000e+00> : vector<2xf32>
    %32 = vector.multi_reduction <add>, %31, %cst_27 [1] : vector<2x128xf32> to vector<2xf32>
    %33 = vector.shape_cast %32 : vector<2xf32> to vector<2x1xf32>
    %cst_28 = arith.constant 1.000000e-24 : f32
    %34 = vector.broadcast %cst_28 : f32 to vector<2x1xf32>
    %35 = arith.maximumf %33, %34 : vector<2x1xf32>
    %36 = math.rsqrt %35 : vector<2x1xf32>
    %37 = vector.broadcast %36 : vector<2x1xf32> to vector<2x128xf32>
    %38 = arith.mulf %24, %37 : vector<2x128xf32>
    %39 = arith.mulf %27, %27 : vector<2x128xf32>
    %cst_29 = arith.constant dense<0.000000e+00> : vector<2xf32>
    %40 = vector.multi_reduction <add>, %39, %cst_29 [1] : vector<2x128xf32> to vector<2xf32>
    %41 = vector.shape_cast %40 : vector<2xf32> to vector<2x1xf32>
    %cst_30 = arith.constant 1.000000e-24 : f32
    %42 = vector.broadcast %cst_30 : f32 to vector<2x1xf32>
    %43 = arith.maximumf %41, %42 : vector<2x1xf32>
    %44 = math.rsqrt %43 : vector<2x1xf32>
    %45 = vector.broadcast %44 : vector<2x1xf32> to vector<2x128xf32>
    %46 = arith.mulf %27, %45 : vector<2x128xf32>
    %47 = arith.mulf %30, %30 : vector<2x128xf32>
    %cst_31 = arith.constant dense<0.000000e+00> : vector<2xf32>
    %48 = vector.multi_reduction <add>, %47, %cst_31 [1] : vector<2x128xf32> to vector<2xf32>
    %49 = vector.shape_cast %48 : vector<2xf32> to vector<2x1xf32>
    %cst_32 = arith.constant 1.000000e-24 : f32
    %50 = vector.broadcast %cst_32 : f32 to vector<2x1xf32>
    %51 = arith.maximumf %49, %50 : vector<2x1xf32>
    %52 = math.rsqrt %51 : vector<2x1xf32>
    %53 = vector.broadcast %52 : vector<2x1xf32> to vector<2x128xf32>
    %54 = arith.mulf %30, %53 : vector<2x128xf32>
    %55 = arith.truncf %38 : vector<2x128xf32> to vector<2x128xbf16>
    %56 = arith.truncf %46 : vector<2x128xf32> to vector<2x128xbf16>
    %cst_33 = arith.constant dense<0.000000e+00> : vector<2x2xf32>
    %57 = tpu.matmul %55, %56, %cst_33 {dimension_numbers = #tpu.dot_dimension_numbers<[1], [1], [0], [0], [0, 0, 1, 0], [], []>} : vector<2x128xbf16>, vector<2x128xbf16>, vector<2x2xf32> -> vector<2x2xf32>
    %cst_34 = arith.constant 14.2857141 : f32
    %58 = vector.broadcast %cst_34 : f32 to vector<2x2xf32>
    %59 = arith.mulf %57, %58 : vector<2x2xf32>
    %60 = arith.truncf %38 : vector<2x128xf32> to vector<2x128xbf16>
    %61 = arith.truncf %54 : vector<2x128xf32> to vector<2x128xbf16>
    %cst_35 = arith.constant dense<0.000000e+00> : vector<2x2xf32>
    %62 = tpu.matmul %60, %61, %cst_35 {dimension_numbers = #tpu.dot_dimension_numbers<[1], [1], [0], [0], [0, 0, 1, 0], [], []>} : vector<2x128xbf16>, vector<2x128xbf16>, vector<2x2xf32> -> vector<2x2xf32>
    %cst_36 = arith.constant 14.2857141 : f32
    %63 = vector.broadcast %cst_36 : f32 to vector<2x2xf32>
    %64 = arith.mulf %62, %63 : vector<2x2xf32>
    %c10 = arith.constant 10 : index
    %c0_37 = arith.constant 0 : index
    %65 = vector.load %arg5[%c10, %c0_37] : memref<16x128xf32, #tpu.memory_space<vmem>>, vector<2x2xf32>
    tpu.vector_store %arg5[%c10, %c0_37], %59 {strides = array<i32>} : memref<16x128xf32, #tpu.memory_space<vmem>>, vector<2x2xf32>,
    %c10_38 = arith.constant 10 : index
    %c2 = arith.constant 2 : index
    %66 = vector.load %arg5[%c10_38, %c2] : memref<16x128xf32, #tpu.memory_space<vmem>>, vector<2x2xf32>
    tpu.vector_store %arg5[%c10_38, %c2], %64 {strides = array<i32>} : memref<16x128xf32, #tpu.memory_space<vmem>>, vector<2x2xf32>,
    return
  }
}

</mosaic_0001>

<llo_original>
// kernel: medclip_forward.1
$region0: #{medclip_forward.1}
  #allocation0 [shape = 'u32[]', space=smem, size = 0x4, offset = 0x4, fixed_abs, tag = 'smem constant byte address 0x4 - core index']
  #allocation1 [shape = 'u32[144,128]{1,0:T(1,128)}', space=vmem, size = 0x12000, scoped, tag = 'internal scratch']
  %s0 = inlined_call_operand.vmem [shape: bf16[8,256], index: 0, kind: input, shape index: {}]
  %s1 = inlined_call_operand.vmem [shape: bf16[256,128], index: 1, kind: input, shape index: {}]
  %s2 = inlined_call_operand.vmem [shape: bf16[128,384], index: 2, kind: input, shape index: {}]
  %s3 = inlined_call_operand.vmem [shape: bf16[64,128], index: 3, kind: input, shape index: {}]
  %s4 = inlined_call_operand.vmem [shape: f32[8,128], index: 4, kind: input, shape index: {}]
  %s5 = inlined_call_operand.vmem [shape: f32[16,128], index: 5, kind: output, shape index: {}]
  %s6 = sld [smem:[#allocation0]]
  $region30: #{medclip_forward.1} parent=0
    _
  %s8 = ssub.s32 1, %s6
  %s9 = scalar_select 0, %s8, %s6
  // Predicated region
  $region2: #{medclip_forward.1} parent=0 // pred_check
    _
  $region3: #{medclip_forward.1} parent=0 // pred_check_branch
    %11 = sbr.rel (0) target = $region5
  $region4: #{medclip_forward.1} parent=0 // pred_region
    _
  $region5: #{medclip_forward.1} parent=0 // pred_fallthru
    _
  // Predicated region
  $region6: #{medclip_forward.1} parent=0 // pred_check
    _
  $region7: #{medclip_forward.1} parent=0 // pred_check_branch
    %13 = sbr.rel (0) target = $region9
  $region8: #{medclip_forward.1} parent=0 // pred_region
    _
  $region9: #{medclip_forward.1} parent=0 // pred_fallthru
    _
  // Predicated region
  $region10: #{medclip_forward.1} parent=0 // pred_check
    _
  $region11: #{medclip_forward.1} parent=0 // pred_check_branch
    %15 = sbr.rel (0) target = $region13
  $region12: #{medclip_forward.1} parent=0 // pred_region
    _
  $region13: #{medclip_forward.1} parent=0 // pred_fallthru
    _
  // Predicated region
  $region14: #{medclip_forward.1} parent=0 // pred_check
    _
  $region15: #{medclip_forward.1} parent=0 // pred_check_branch
    %17 = sbr.rel (0) target = $region17
  $region16: #{medclip_forward.1} parent=0 // pred_region
    _
  $region17: #{medclip_forward.1} parent=0 // pred_fallthru
    _
  // Predicated region
  $region18: #{medclip_forward.1} parent=0 // pred_check
    _
  $region19: #{medclip_forward.1} parent=0 // pred_check_branch
    %19 = sbr.rel (0) target = $region21
  $region20: #{medclip_forward.1} parent=0 // pred_region
    _
  $region21: #{medclip_forward.1} parent=0 // pred_fallthru
    _
  %21 = vst [vmem:[%s5] sm:$0xff] 0.0
  %22 = vst [vmem:[%s5 + $0x8] sm:$0xff] 0.0
  %v23 = vld [vmem:[%s0] sm:$0xff]
  %v24 = vld [vmem:[%s1] sm:$0xf]
  %v25 = vld [vmem:[%s1 + $0x4] sm:$0xf]
  %v26 = vld [vmem:[%s1 + $0x8] sm:$0xf]
  %v27 = vld [vmem:[%s1 + $0xc] sm:$0xf]
  %v28 = vld [vmem:[%s1 + $0x10] sm:$0xf]
  %v29 = vld [vmem:[%s1 + $0x14] sm:$0xf]
  %v30 = vld [vmem:[%s1 + $0x18] sm:$0xf]
  %v31 = vld [vmem:[%s1 + $0x1c] sm:$0xf]
  %v32 = vld [vmem:[%s1 + $0x20] sm:$0xf]
  %v33 = vld [vmem:[%s1 + $0x24] sm:$0xf]
  %v34 = vld [vmem:[%s1 + $0x28] sm:$0xf]
  %v35 = vld [vmem:[%s1 + $0x2c] sm:$0xf]
  %v36 = vld [vmem:[%s1 + $0x30] sm:$0xf]
  %v37 = vld [vmem:[%s1 + $0x34] sm:$0xf]
  %v38 = vld [vmem:[%s1 + $0x38] sm:$0xf]
  %v39 = vld [vmem:[%s1 + $0x3c] sm:$0xf]
  %v40 = vld [vmem:[%s1 + $0x40] sm:$0xf]
  %v41 = vld [vmem:[%s1 + $0x44] sm:$0xf]
  %v42 = vld [vmem:[%s1 + $0x48] sm:$0xf]
  %v43 = vld [vmem:[%s1 + $0x4c] sm:$0xf]
  %v44 = vld [vmem:[%s1 + $0x50] sm:$0xf]
  %v45 = vld [vmem:[%s1 + $0x54] sm:$0xf]
  %v46 = vld [vmem:[%s1 + $0x58] sm:$0xf]
  %v47 = vld [vmem:[%s1 + $0x5c] sm:$0xf]
  %v48 = vld [vmem:[%s1 + $0x60] sm:$0xf]
  %v49 = vld [vmem:[%s1 + $0x64] sm:$0xf]
  %v50 = vld [vmem:[%s1 + $0x68] sm:$0xf]
  %v51 = vld [vmem:[%s1 + $0x6c] sm:$0xf]
  %v52 = vld [vmem:[%s1 + $0x70] sm:$0xf]
  %v53 = vld [vmem:[%s1 + $0x74] sm:$0xf]
  %v54 = vld [vmem:[%s1 + $0x78] sm:$0xf]
  %v55 = vld [vmem:[%s1 + $0x7c] sm:$0xf]
  %v56 = vld [vmem:[%s4] sm:$0x1]
  %v57 = vlaneseq
  %v58 = vshrl.u32 %v57, 7
  %v59 = vsub.s32 0, %v58
  %v60 = vrot.slane %v56, %v59
  %v62 = vunpack.c.l.b16 %v23
  %v63 = vunpack.c.h.b16 %v23
  %v64 = vpack.c.b16 %v62, %v62
  %v65 = vpack.c.b16 %v63, %v63
  %v100 = vunpack.c.l.b16 %v24
  %v101 = vunpack.c.l.b16 %v25
  %v102 = vunpack.c.l.b16 %v26
  %v103 = vunpack.c.l.b16 %v27
  %v104 = vunpack.c.l.b16 %v28
  %v105 = vunpack.c.l.b16 %v29
  %v106 = vunpack.c.l.b16 %v30
  %v107 = vunpack.c.l.b16 %v31
  %v108 = vunpack.c.l.b16 %v32
  %v109 = vunpack.c.l.b16 %v33
  %v110 = vunpack.c.l.b16 %v34
  %v111 = vunpack.c.l.b16 %v35
  %v112 = vunpack.c.l.b16 %v36
  %v113 = vunpack.c.l.b16 %v37
  %v114 = vunpack.c.l.b16 %v38
  %v115 = vunpack.c.l.b16 %v39
  %v116 = vunpack.c.l.b16 %v40
  %v117 = vunpack.c.l.b16 %v41
  %v118 = vunpack.c.l.b16 %v42
  %v119 = vunpack.c.l.b16 %v43
  %v120 = vunpack.c.l.b16 %v44
  %v121 = vunpack.c.l.b16 %v45
  %v122 = vunpack.c.l.b16 %v46
  %v123 = vunpack.c.l.b16 %v47
  %v124 = vunpack.c.l.b16 %v48
  %v125 = vunpack.c.l.b16 %v49
  %v126 = vunpack.c.l.b16 %v50
  %v127 = vunpack.c.l.b16 %v51
  %v128 = vunpack.c.l.b16 %v52
  %v129 = vunpack.c.l.b16 %v53
  %v130 = vunpack.c.l.b16 %v54
  %v131 = vunpack.c.l.b16 %v55
  %v132 = vpack.c.b16 %v101, %v100
  %v133 = vpack.c.b16 %v103, %v102
  %v134 = vpack.c.b16 %v105, %v104
  %v135 = vpack.c.b16 %v107, %v106
  %v136 = vpack.c.b16 %v109, %v108
  %v137 = vpack.c.b16 %v111, %v110
  %v138 = vpack.c.b16 %v113, %v112
  %v139 = vpack.c.b16 %v115, %v114
  %v140 = vpack.c.b16 %v117, %v116
  %v141 = vpack.c.b16 %v119, %v118
  %v142 = vpack.c.b16 %v121, %v120
  %v143 = vpack.c.b16 %v123, %v122
  %v144 = vpack.c.b16 %v125, %v124
  %v145 = vpack.c.b16 %v127, %v126
  %v146 = vpack.c.b16 %v129, %v128
  %v147 = vpack.c.b16 %v131, %v130
  %164 = vmatprep.subr.bf16.mxu0 0
  %165 = vmatpush1.bf16.msra.mxu0 %v132
  %166 = vmatprep.subr.bf16.mxu0 0
  %167 = vmatpush1.bf16.msra.mxu0 %v133
  %168 = vmatprep.subr.bf16.mxu0 0
  %169 = vmatpush1.bf16.msra.mxu0 %v134
  %170 = vmatprep.subr.bf16.mxu0 0
  %171 = vmatpush1.bf16.msra.mxu0 %v135
  %172 = vmatprep.subr.bf16.mxu0 0
  %173 = vmatpush1.bf16.msra.mxu0 %v136
  %174 = vmatprep.subr.bf16.mxu0 0
  %175 = vmatpush1.bf16.msra.mxu0 %v137
  %176 = vmatprep.subr.bf16.mxu0 0
  %177 = vmatpush1.bf16.msra.mxu0 %v138
  %178 = vmatprep.subr.bf16.mxu0 0
  %179 = vmatpush1.bf16.msra.mxu0 %v139
  %180 = vmatprep.subr.bf16.mxu0 0
  %181 = vmatpush1.bf16.msra.mxu0 %v140
  %182 = vmatprep.subr.bf16.mxu0 0
  %183 = vmatpush1.bf16.msra.mxu0 %v141
  %184 = vmatprep.subr.bf16.mxu0 0
  %185 = vmatpush1.bf16.msra.mxu0 %v142
  %186 = vmatprep.subr.bf16.mxu0 0
  %187 = vmatpush1.bf16.msra.mxu0 %v143
  %188 = vmatprep.subr.bf16.mxu0 0
  %189 = vmatpush1.bf16.msra.mxu0 %v144
  %190 = vmatprep.subr.bf16.mxu0 0
  %191 = vmatpush1.bf16.msra.mxu0 %v145
  %192 = vmatprep.subr.bf16.mxu0 0
  %193 = vmatpush1.bf16.msra.mxu0 %v146
  %194 = vmatprep.subr.bf16.mxu0 0
  %195 = vmatpush1.bf16.msra.mxu0 %v147
  %196 = vmatprep.mubr.bf16.mxu0 %v65
  %197 = vmatmul.mubr.bf16.gmra.mrb[0].mxu0 %v64
  %v198 = vpop.f32.mrb[0].mxu0
  %v199 = vadd.f32 %v60, %v198
  %v200 = vpop.f32.mrb[0].mxu0
  %v201 = vpop.f32.mrb[0].mxu0
  %v202 = vpop.f32.mrb[0].mxu0
  %203 = vdwg.mxu0
  %204 = vst [vmem:[%s5] sm:$0xff] %v199
  %v205 = vld [vmem:[%s4 + $0x1] sm:$0x3]
  %v206 = vpack.c.bf16 %v205, %v205
  %v207 = vpack.c.bf16 %v199, %v199
  %vm208 = vcmask 64512
  %v210 = vsel %vm208, %v206, 0
  %vm212 = vcmask 1043456
  %v214 = vsel %vm212, %v207, 0
  %216 = vmatprep.subr.bf16.mxu0 0
  %217 = vmatpush1.bf16.msra.mxu0 %v214
  %218 = vmatprep.subr.bf16.mxu0 0
  %219 = vmatpush1.bf16.msra.mxu0 0
  %220 = vmatprep.subr.bf16.mxu0 0
  %221 = vmatpush1.bf16.msra.mxu0 0
  %222 = vmatprep.subr.bf16.mxu0 0
  %223 = vmatpush1.bf16.msra.mxu0 0
  %224 = vmatprep.subr.bf16.mxu0 0
  %225 = vmatpush1.bf16.msra.mxu0 0
  %226 = vmatprep.subr.bf16.mxu0 0
  %227 = vmatpush1.bf16.msra.mxu0 0
  %228 = vmatprep.subr.bf16.mxu0 0
  %229 = vmatpush1.bf16.msra.mxu0 0
  %230 = vmatprep.subr.bf16.mxu0 0
  %231 = vmatpush1.bf16.msra.mxu0 0
  %232 = vmatprep.subr.bf16.mxu0 0
  %233 = vmatpush1.bf16.msra.mxu0 0
  %234 = vmatprep.subr.bf16.mxu0 0
  %235 = vmatpush1.bf16.msra.mxu0 0
  %236 = vmatprep.subr.bf16.mxu0 0
  %237 = vmatpush1.bf16.msra.mxu0 0
  %238 = vmatprep.subr.bf16.mxu0 0
  %239 = vmatpush1.bf16.msra.mxu0 0
  %240 = vmatprep.subr.bf16.mxu0 0
  %241 = vmatpush1.bf16.msra.mxu0 0
  %242 = vmatprep.subr.bf16.mxu0 0
  %243 = vmatpush1.bf16.msra.mxu0 0
  %244 = vmatprep.subr.bf16.mxu0 0
  %245 = vmatpush1.bf16.msra.mxu0 0
  %246 = vmatprep.subr.bf16.mxu0 0
  %247 = vmatpush1.bf16.msra.mxu0 0
  %248 = vmatprep.mubr.bf16.mxu0 0
  %249 = vmatmul.mubr.bf16.gmra.mrb[0].mxu0 %v210
  %v250 = vpop.f32.mrb[0].mxu0
  %v251 = vadd.f32 0.0, %v250
  %v252 = vpop.f32.mrb[0].mxu0
  %v253 = vpop.f32.mrb[0].mxu0
  %v254 = vpop.f32.mrb[0].mxu0
  %255 = vdwg.mxu0
  %256 = vst [vmem:[%s5 + $0x8] sm:$0x3] %v251
  %v257 = vld [vmem:[%s4 + $0x3] sm:$0x3]
  %v258 = vpack.c.bf16 %v257, %v257
  %v259 = vld [vmem:[%s4 + $0x5] sm:$0x3]
  %v260 = vpack.c.bf16 %v259, %v259
  %v261 = vld [vmem:[%s3] sm:$0xf]
  %v262 = vld [vmem:[%s3 + $0x4] sm:$0xf]
  %v263 = vld [vmem:[%s3 + $0x8] sm:$0xf]
  %v264 = vld [vmem:[%s3 + $0xc] sm:$0xf]
  %v269 = vunpack.c.l.b16 %v261
  %v270 = vunpack.c.l.b16 %v262
  %v271 = vunpack.c.l.b16 %v263
  %v272 = vunpack.c.l.b16 %v264
  %v273 = vpack.c.b16 %v270, %v269
  %v274 = vpack.c.b16 %v272, %v271
  %vm277 = vcmask 261120
  %v279 = vsel %vm277, %v258, 0
  %281 = vmatprep.subr.bf16.mxu0 0
  %282 = vmatpush1.bf16.msra.mxu0 %v273
  %283 = vmatprep.subr.bf16.mxu0 0
  %284 = vmatpush1.bf16.msra.mxu0 %v274
  %285 = vmatprep.subr.bf16.mxu0 0
  %286 = vmatpush1.bf16.msra.mxu0 0
  %287 = vmatprep.subr.bf16.mxu0 0
  %288 = vmatpush1.bf16.msra.mxu0 0
  %289 = vmatprep.subr.bf16.mxu0 0
  %290 = vmatpush1.bf16.msra.mxu0 0
  %291 = vmatprep.subr.bf16.mxu0 0
  %292 = vmatpush1.bf16.msra.mxu0 0
  %293 = vmatprep.subr.bf16.mxu0 0
  %294 = vmatpush1.bf16.msra.mxu0 0
  %295 = vmatprep.subr.bf16.mxu0 0
  %296 = vmatpush1.bf16.msra.mxu0 0
  %297 = vmatprep.subr.bf16.mxu0 0
  %298 = vmatpush1.bf16.msra.mxu0 0
  %299 = vmatprep.subr.bf16.mxu0 0
  %300 = vmatpush1.bf16.msra.mxu0 0
  %301 = vmatprep.subr.bf16.mxu0 0
  %302 = vmatpush1.bf16.msra.mxu0 0
  %303 = vmatprep.subr.bf16.mxu0 0
  %304 = vmatpush1.bf16.msra.mxu0 0
  %305 = vmatprep.subr.bf16.mxu0 0
  %306 = vmatpush1.bf16.msra.mxu0 0
  %307 = vmatprep.subr.bf16.mxu0 0
  %308 = vmatpush1.bf16.msra.mxu0 0
  %309 = vmatprep.subr.bf16.mxu0 0
  %310 = vmatpush1.bf16.msra.mxu0 0
  %311 = vmatprep.subr.bf16.mxu0 0
  %312 = vmatpush1.bf16.msra.mxu0 0
  %313 = vmatprep.mubr.bf16.mxu0 0
  %314 = vmatmul.mubr.bf16.gmra.mrb[0].mxu0 %v279
  %v315 = vpop.f32.mrb[0].mxu0
  %v316 = vadd.f32 0.0, %v315
  %v317 = vpop.f32.mrb[0].mxu0
  %v318 = vpop.f32.mrb[0].mxu0
  %v319 = vpop.f32.mrb[0].mxu0
  %320 = vdwg.mxu0
  %v321 = vld [vmem:[%s3 + $0x10] sm:$0xf]
  %v322 = vld [vmem:[%s3 + $0x14] sm:$0xf]
  %v323 = vld [vmem:[%s3 + $0x18] sm:$0xf]
  %v324 = vld [vmem:[%s3 + $0x1c] sm:$0xf]
  %v329 = vunpack.c.l.b16 %v321
  %v330 = vunpack.c.l.b16 %v322
  %v331 = vunpack.c.l.b16 %v323
  %v332 = vunpack.c.l.b16 %v324
  %v333 = vpack.c.b16 %v330, %v329
  %v334 = vpack.c.b16 %v332, %v331
  %v338 = vsel %vm277, %v260, 0
  %340 = vmatprep.subr.bf16.mxu0 0
  %341 = vmatpush1.bf16.msra.mxu0 %v333
  %342 = vmatprep.subr.bf16.mxu0 0
  %343 = vmatpush1.bf16.msra.mxu0 %v334
  %344 = vmatprep.subr.bf16.mxu0 0
  %345 = vmatpush1.bf16.msra.mxu0 0
  %346 = vmatprep.subr.bf16.mxu0 0
  %347 = vmatpush1.bf16.msra.mxu0 0
  %348 = vmatprep.subr.bf16.mxu0 0
  %349 = vmatpush1.bf16.msra.mxu0 0
  %350 = vmatprep.subr.bf16.mxu0 0
  %351 = vmatpush1.bf16.msra.mxu0 0
  %352 = vmatprep.subr.bf16.mxu0 0
  %353 = vmatpush1.bf16.msra.mxu0 0
  %354 = vmatprep.subr.bf16.mxu0 0
  %355 = vmatpush1.bf16.msra.mxu0 0
  %356 = vmatprep.subr.bf16.mxu0 0
  %357 = vmatpush1.bf16.msra.mxu0 0
  %358 = vmatprep.subr.bf16.mxu0 0
  %359 = vmatpush1.bf16.msra.mxu0 0
  %360 = vmatprep.subr.bf16.mxu0 0
  %361 = vmatpush1.bf16.msra.mxu0 0
  %362 = vmatprep.subr.bf16.mxu0 0
  %363 = vmatpush1.bf16.msra.mxu0 0
  %364 = vmatprep.subr.bf16.mxu0 0
  %365 = vmatpush1.bf16.msra.mxu0 0
  %366 = vmatprep.subr.bf16.mxu0 0
  %367 = vmatpush1.bf16.msra.mxu0 0
  %368 = vmatprep.subr.bf16.mxu0 0
  %369 = vmatpush1.bf16.msra.mxu0 0
  %370 = vmatprep.subr.bf16.mxu0 0
  %371 = vmatpush1.bf16.msra.mxu0 0
  %372 = vmatprep.mubr.bf16.mxu0 0
  %373 = vmatmul.mubr.bf16.gmra.mrb[0].mxu0 %v338
  %v374 = vpop.f32.mrb[0].mxu0
  %v375 = vadd.f32 0.0, %v374
  %v376 = vpop.f32.mrb[0].mxu0
  %v377 = vpop.f32.mrb[0].mxu0
  %v378 = vpop.f32.mrb[0].mxu0
  %379 = vdwg.mxu0
  %v380 = vpack.c.bf16 %v251, %v251
  %v381 = vld [vmem:[%s2] sm:$0xf]
  %v382 = vld [vmem:[%s2 + $0xc] sm:$0xf]
  %v383 = vld [vmem:[%s2 + $0x18] sm:$0xf]
  %v384 = vld [vmem:[%s2 + $0x24] sm:$0xf]
  %v385 = vld [vmem:[%s2 + $0x30] sm:$0xf]
  %v386 = vld [vmem:[%s2 + $0x3c] sm:$0xf]
  %v387 = vld [vmem:[%s2 + $0x48] sm:$0xf]
  %v388 = vld [vmem:[%s2 + $0x54] sm:$0xf]
  %v389 = vld [vmem:[%s2 + $0x60] sm:$0xf]
  %v390 = vld [vmem:[%s2 + $0x6c] sm:$0xf]
  %v391 = vld [vmem:[%s2 + $0x78] sm:$0xf]
  %v392 = vld [vmem:[%s2 + $0x84] sm:$0xf]
  %v393 = vld [vmem:[%s2 + $0x90] sm:$0xf]
  %v394 = vld [vmem:[%s2 + $0x9c] sm:$0xf]
  %v395 = vld [vmem:[%s2 + $0xa8] sm:$0xf]
  %v396 = vld [vmem:[%s2 + $0xb4] sm:$0xf]
  %v413 = vunpack.c.l.b16 %v381
  %v414 = vunpack.c.l.b16 %v382
  %v415 = vunpack.c.l.b16 %v383
  %v416 = vunpack.c.l.b16 %v384
  %v417 = vunpack.c.l.b16 %v385
  %v418 = vunpack.c.l.b16 %v386
  %v419 = vunpack.c.l.b16 %v387
  %v420 = vunpack.c.l.b16 %v388
  %v421 = vunpack.c.l.b16 %v389
  %v422 = vunpack.c.l.b16 %v390
  %v423 = vunpack.c.l.b16 %v391
  %v424 = vunpack.c.l.b16 %v392
  %v425 = vunpack.c.l.b16 %v393
  %v426 = vunpack.c.l.b16 %v394
  %v427 = vunpack.c.l.b16 %v395
  %v428 = vunpack.c.l.b16 %v396
  %v429 = vpack.c.b16 %v414, %v413
  %v430 = vpack.c.b16 %v416, %v415
  %v431 = vpack.c.b16 %v418, %v417
  %v432 = vpack.c.b16 %v420, %v419
  %v433 = vpack.c.b16 %v422, %v421
  %v434 = vpack.c.b16 %v424, %v423
  %v435 = vpack.c.b16 %v426, %v425
  %v436 = vpack.c.b16 %v428, %v427
  %445 = vmatprep.subr.bf16.mxu0 0
  %446 = vmatpush1.bf16.msra.mxu0 %v429
  %447 = vmatprep.subr.bf16.mxu0 0
  %448 = vmatpush1.bf16.msra.mxu0 %v430
  %449 = vmatprep.subr.bf16.mxu0 0
  %450 = vmatpush1.bf16.msra.mxu0 %v431
  %451 = vmatprep.subr.bf16.mxu0 0
  %452 = vmatpush1.bf16.msra.mxu0 %v432
  %453 = vmatprep.subr.bf16.mxu0 0
  %454 = vmatpush1.bf16.msra.mxu0 %v433
  %455 = vmatprep.subr.bf16.mxu0 0
  %456 = vmatpush1.bf16.msra.mxu0 %v434
  %457 = vmatprep.subr.bf16.mxu0 0
  %458 = vmatpush1.bf16.msra.mxu0 %v435
  %459 = vmatprep.subr.bf16.mxu0 0
  %460 = vmatpush1.bf16.msra.mxu0 %v436
  %461 = vmatprep.subr.bf16.mxu0 0
  %462 = vmatpush1.bf16.msra.mxu0 0
  %463 = vmatprep.subr.bf16.mxu0 0
  %464 = vmatpush1.bf16.msra.mxu0 0
  %465 = vmatprep.subr.bf16.mxu0 0
  %466 = vmatpush1.bf16.msra.mxu0 0
  %467 = vmatprep.subr.bf16.mxu0 0
  %468 = vmatpush1.bf16.msra.mxu0 0
  %469 = vmatprep.subr.bf16.mxu0 0
  %470 = vmatpush1.bf16.msra.mxu0 0
  %471 = vmatprep.subr.bf16.mxu0 0
  %472 = vmatpush1.bf16.msra.mxu0 0
  %473 = vmatprep.subr.bf16.mxu0 0
  %474 = vmatpush1.bf16.msra.mxu0 0
  %475 = vmatprep.subr.bf16.mxu0 0
  %476 = vmatpush1.bf16.msra.mxu0 0
  %477 = vmatprep.mubr.bf16.mxu0 0
  %478 = vmatmul.mubr.bf16.gmra.mrb[0].mxu0 %v380
  %v479 = vpop.f32.mrb[0].mxu0
  %v480 = vadd.f32 0.0, %v479
  %v481 = vpop.f32.mrb[0].mxu0
  %v482 = vpop.f32.mrb[0].mxu0
  %v483 = vpop.f32.mrb[0].mxu0
  %484 = vdwg.mxu0
  %v485 = vpack.c.bf16 %v316, %v316
  %v486 = vld [vmem:[%s2 + $0x4] sm:$0xf]
  %v487 = vld [vmem:[%s2 + $0x10] sm:$0xf]
  %v488 = vld [vmem:[%s2 + $0x1c] sm:$0xf]
  %v489 = vld [vmem:[%s2 + $0x28] sm:$0xf]
  %v490 = vld [vmem:[%s2 + $0x34] sm:$0xf]
  %v491 = vld [vmem:[%s2 + $0x40] sm:$0xf]
  %v492 = vld [vmem:[%s2 + $0x4c] sm:$0xf]
  %v493 = vld [vmem:[%s2 + $0x58] sm:$0xf]
  %v494 = vld [vmem:[%s2 + $0x64] sm:$0xf]
  %v495 = vld [vmem:[%s2 + $0x70] sm:$0xf]
  %v496 = vld [vmem:[%s2 + $0x7c] sm:$0xf]
  %v497 = vld [vmem:[%s2 + $0x88] sm:$0xf]
  %v498 = vld [vmem:[%s2 + $0x94] sm:$0xf]
  %v499 = vld [vmem:[%s2 + $0xa0] sm:$0xf]
  %v500 = vld [vmem:[%s2 + $0xac] sm:$0xf]
  %v501 = vld [vmem:[%s2 + $0xb8] sm:$0xf]
  %v518 = vunpack.c.l.b16 %v486
  %v519 = vunpack.c.l.b16 %v487
  %v520 = vunpack.c.l.b16 %v488
  %v521 = vunpack.c.l.b16 %v489
  %v522 = vunpack.c.l.b16 %v490
  %v523 = vunpack.c.l.b16 %v491
  %v524 = vunpack.c.l.b16 %v492
  %v525 = vunpack.c.l.b16 %v493
  %v526 = vunpack.c.l.b16 %v494
  %v527 = vunpack.c.l.b16 %v495
  %v528 = vunpack.c.l.b16 %v496
  %v529 = vunpack.c.l.b16 %v497
  %v530 = vunpack.c.l.b16 %v498
  %v531 = vunpack.c.l.b16 %v499
  %v532 = vunpack.c.l.b16 %v500
  %v533 = vunpack.c.l.b16 %v501
  %v534 = vpack.c.b16 %v519, %v518
  %v535 = vpack.c.b16 %v521, %v520
  %v536 = vpack.c.b16 %v523, %v522
  %v537 = vpack.c.b16 %v525, %v524
  %v538 = vpack.c.b16 %v527, %v526
  %v539 = vpack.c.b16 %v529, %v528
  %v540 = vpack.c.b16 %v531, %v530
  %v541 = vpack.c.b16 %v533, %v532
  %550 = vmatprep.subr.bf16.mxu0 0
  %551 = vmatpush1.bf16.msra.mxu0 %v534
  %552 = vmatprep.subr.bf16.mxu0 0
  %553 = vmatpush1.bf16.msra.mxu0 %v535
  %554 = vmatprep.subr.bf16.mxu0 0
  %555 = vmatpush1.bf16.msra.mxu0 %v536
  %556 = vmatprep.subr.bf16.mxu0 0
  %557 = vmatpush1.bf16.msra.mxu0 %v537
  %558 = vmatprep.subr.bf16.mxu0 0
  %559 = vmatpush1.bf16.msra.mxu0 %v538
  %560 = vmatprep.subr.bf16.mxu0 0
  %561 = vmatpush1.bf16.msra.mxu0 %v539
  %562 = vmatprep.subr.bf16.mxu0 0
  %563 = vmatpush1.bf16.msra.mxu0 %v540
  %564 = vmatprep.subr.bf16.mxu0 0
  %565 = vmatpush1.bf16.msra.mxu0 %v541
  %566 = vmatprep.subr.bf16.mxu0 0
  %567 = vmatpush1.bf16.msra.mxu0 0
  %568 = vmatprep.subr.bf16.mxu0 0
  %569 = vmatpush1.bf16.msra.mxu0 0
  %570 = vmatprep.subr.bf16.mxu0 0
  %571 = vmatpush1.bf16.msra.mxu0 0
  %572 = vmatprep.subr.bf16.mxu0 0
  %573 = vmatpush1.bf16.msra.mxu0 0
  %574 = vmatprep.subr.bf16.mxu0 0
  %575 = vmatpush1.bf16.msra.mxu0 0
  %576 = vmatprep.subr.bf16.mxu0 0
  %577 = vmatpush1.bf16.msra.mxu0 0
  %578 = vmatprep.subr.bf16.mxu0 0
  %579 = vmatpush1.bf16.msra.mxu0 0
  %580 = vmatprep.subr.bf16.mxu0 0
  %581 = vmatpush1.bf16.msra.mxu0 0
  %582 = vmatprep.mubr.bf16.mxu0 0
  %583 = vmatmul.mubr.bf16.gmra.mrb[0].mxu0 %v485
  %v584 = vpop.f32.mrb[0].mxu0
  %v585 = vadd.f32 0.0, %v584
  %v586 = vpop.f32.mrb[0].mxu0
  %v587 = vpop.f32.mrb[0].mxu0
  %v588 = vpop.f32.mrb[0].mxu0
  %589 = vdwg.mxu0
  %v590 = vpack.c.bf16 %v375, %v375
  %v591 = vld [vmem:[%s2 + $0x8] sm:$0xf]
  %v592 = vld [vmem:[%s2 + $0x14] sm:$0xf]
  %v593 = vld [vmem:[%s2 + $0x20] sm:$0xf]
  %v594 = vld [vmem:[%s2 + $0x2c] sm:$0xf]
  %v595 = vld [vmem:[%s2 + $0x38] sm:$0xf]
  %v596 = vld [vmem:[%s2 + $0x44] sm:$0xf]
  %v597 = vld [vmem:[%s2 + $0x50] sm:$0xf]
  %v598 = vld [vmem:[%s2 + $0x5c] sm:$0xf]
  %v599 = vld [vmem:[%s2 + $0x68] sm:$0xf]
  %v600 = vld [vmem:[%s2 + $0x74] sm:$0xf]
  %v601 = vld [vmem:[%s2 + $0x80] sm:$0xf]
  %v602 = vld [vmem:[%s2 + $0x8c] sm:$0xf]
  %v603 = vld [vmem:[%s2 + $0x98] sm:$0xf]
  %v604 = vld [vmem:[%s2 + $0xa4] sm:$0xf]
  %v605 = vld [vmem:[%s2 + $0xb0] sm:$0xf]
  %v606 = vld [vmem:[%s2 + $0xbc] sm:$0xf]
  %v623 = vunpack.c.l.b16 %v591
  %v624 = vunpack.c.l.b16 %v592
  %v625 = vunpack.c.l.b16 %v593
  %v626 = vunpack.c.l.b16 %v594
  %v627 = vunpack.c.l.b16 %v595
  %v628 = vunpack.c.l.b16 %v596
  %v629 = vunpack.c.l.b16 %v597
  %v630 = vunpack.c.l.b16 %v598
  %v631 = vunpack.c.l.b16 %v599
  %v632 = vunpack.c.l.b16 %v600
  %v633 = vunpack.c.l.b16 %v601
  %v634 = vunpack.c.l.b16 %v602
  %v635 = vunpack.c.l.b16 %v603
  %v636 = vunpack.c.l.b16 %v604
  %v637 = vunpack.c.l.b16 %v605
  %v638 = vunpack.c.l.b16 %v606
  %v639 = vpack.c.b16 %v624, %v623
  %v640 = vpack.c.b16 %v626, %v625
  %v641 = vpack.c.b16 %v628, %v627
  %v642 = vpack.c.b16 %v630, %v629
  %v643 = vpack.c.b16 %v632, %v631
  %v644 = vpack.c.b16 %v634, %v633
  %v645 = vpack.c.b16 %v636, %v635
  %v646 = vpack.c.b16 %v638, %v637
  %655 = vmatprep.subr.bf16.mxu0 0
  %656 = vmatpush1.bf16.msra.mxu0 %v639
  %657 = vmatprep.subr.bf16.mxu0 0
  %658 = vmatpush1.bf16.msra.mxu0 %v640
  %659 = vmatprep.subr.bf16.mxu0 0
  %660 = vmatpush1.bf16.msra.mxu0 %v641
  %661 = vmatprep.subr.bf16.mxu0 0
  %662 = vmatpush1.bf16.msra.mxu0 %v642
  %663 = vmatprep.subr.bf16.mxu0 0
  %664 = vmatpush1.bf16.msra.mxu0 %v643
  %665 = vmatprep.subr.bf16.mxu0 0
  %666 = vmatpush1.bf16.msra.mxu0 %v644
  %667 = vmatprep.subr.bf16.mxu0 0
  %668 = vmatpush1.bf16.msra.mxu0 %v645
  %669 = vmatprep.subr.bf16.mxu0 0
  %670 = vmatpush1.bf16.msra.mxu0 %v646
  %671 = vmatprep.subr.bf16.mxu0 0
  %672 = vmatpush1.bf16.msra.mxu0 0
  %673 = vmatprep.subr.bf16.mxu0 0
  %674 = vmatpush1.bf16.msra.mxu0 0
  %675 = vmatprep.subr.bf16.mxu0 0
  %676 = vmatpush1.bf16.msra.mxu0 0
  %677 = vmatprep.subr.bf16.mxu0 0
  %678 = vmatpush1.bf16.msra.mxu0 0
  %679 = vmatprep.subr.bf16.mxu0 0
  %680 = vmatpush1.bf16.msra.mxu0 0
  %681 = vmatprep.subr.bf16.mxu0 0
  %682 = vmatpush1.bf16.msra.mxu0 0
  %683 = vmatprep.subr.bf16.mxu0 0
  %684 = vmatpush1.bf16.msra.mxu0 0
  %685 = vmatprep.subr.bf16.mxu0 0
  %686 = vmatpush1.bf16.msra.mxu0 0
  %687 = vmatprep.mubr.bf16.mxu0 0
  %688 = vmatmul.mubr.bf16.gmra.mrb[0].mxu0 %v590
  %v689 = vpop.f32.mrb[0].mxu0
  %v690 = vadd.f32 0.0, %v689
  %v691 = vpop.f32.mrb[0].mxu0
  %v692 = vpop.f32.mrb[0].mxu0
  %v693 = vpop.f32.mrb[0].mxu0
  %694 = vdwg.mxu0
  %v695 = vmul.f32 %v480, %v480
  %vm696 = vcmask 1041408
  %v697 = vsel %vm696, %v695, 0.0
  %698 = vadd.xlane.f32.xlu0 %v697
  %v699 = vpop.xlane.xlu0 %698
  %v700 = vmax.f32 %v699, 1e-24
  %v701 = vrsqrt.pop %v700
  %v702 = vmul.f32 %v480, %v701
  %v703 = vmul.f32 %v585, %v585
  %v704 = vsel %vm696, %v703, 0.0
  %705 = vadd.xlane.f32.xlu0 %v704
  %v706 = vpop.xlane.xlu0 %705
  %v707 = vmax.f32 %v706, 1e-24
  %v708 = vrsqrt.pop %v707
  %v709 = vmul.f32 %v585, %v708
  %v710 = vmul.f32 %v690, %v690
  %v711 = vsel %vm696, %v710, 0.0
  %712 = vadd.xlane.f32.xlu0 %v711
  %v713 = vpop.xlane.xlu0 %712
  %v714 = vmax.f32 %v713, 1e-24
  %v715 = vrsqrt.pop %v714
  %v716 = vmul.f32 %v690, %v715
  %v717 = vpack.c.bf16 %v702, %v702
  %v718 = vpack.c.bf16 %v709, %v709
  %719 = vmatprep.subr.bf16.mxu0 0
  %720 = vmatpush1.bf16.xpose.msra.mxu0 %v718
  %721 = vmatprep.subr.bf16.mxu0 0
  %722 = vmatpush1.bf16.xpose.msra.mxu0 0
  %723 = vmatprep.subr.bf16.mxu0 0
  %724 = vmatpush1.bf16.xpose.msra.mxu0 0
  %725 = vmatprep.subr.bf16.mxu0 0
  %726 = vmatpush1.bf16.xpose.msra.mxu0 0
  %727 = vmatprep.subr.bf16.mxu0 0
  %728 = vmatpush1.bf16.xpose.msra.mxu0 0
  %729 = vmatprep.subr.bf16.mxu0 0
  %730 = vmatpush1.bf16.xpose.msra.mxu0 0
  %731 = vmatprep.subr.bf16.mxu0 0
  %732 = vmatpush1.bf16.xpose.msra.mxu0 0
  %733 = vmatprep.subr.bf16.mxu0 0
  %734 = vmatpush1.bf16.xpose.msra.mxu0 0
  %735 = vmatprep.subr.bf16.mxu0 0
  %736 = vmatpush1.bf16.xpose.msra.mxu0 0
  %737 = vmatprep.subr.bf16.mxu0 0
  %738 = vmatpush1.bf16.xpose.msra.mxu0 0
  %739 = vmatprep.subr.bf16.mxu0 0
  %740 = vmatpush1.bf16.xpose.msra.mxu0 0
  %741 = vmatprep.subr.bf16.mxu0 0
  %742 = vmatpush1.bf16.xpose.msra.mxu0 0
  %743 = vmatprep.subr.bf16.mxu0 0
  %744 = vmatpush1.bf16.xpose.msra.mxu0 0
  %745 = vmatprep.subr.bf16.mxu0 0
  %746 = vmatpush1.bf16.xpose.msra.mxu0 0
  %747 = vmatprep.subr.bf16.mxu0 0
  %748 = vmatpush1.bf16.xpose.msra.mxu0 0
  %749 = vmatprep.subr.bf16.mxu0 0
  %750 = vmatpush1.bf16.xpose.msra.mxu0 0
  %751 = vmatprep.mubr.bf16.mxu0 0
  %752 = vmatmul.mubr.bf16.gmra.mrb[0].mxu0 %v717
  %v753 = vpop.f32.mrb[0].mxu0
  %v754 = vadd.f32 0.0, %v753
  %v755 = vpop.f32.mrb[0].mxu0
  %v756 = vpop.f32.mrb[0].mxu0
  %v757 = vpop.f32.mrb[0].mxu0
  %758 = vdwg.mxu0
  %v759 = vmul.f32 %v754, 14.285714
  %v760 = vpack.c.bf16 %v716, %v716
  %761 = vmatprep.subr.bf16.mxu0 0
  %762 = vmatpush1.bf16.xpose.msra.mxu0 %v760
  %763 = vmatprep.subr.bf16.mxu0 0
  %764 = vmatpush1.bf16.xpose.msra.mxu0 0
  %765 = vmatprep.subr.bf16.mxu0 0
  %766 = vmatpush1.bf16.xpose.msra.mxu0 0
  %767 = vmatprep.subr.bf16.mxu0 0
  %768 = vmatpush1.bf16.xpose.msra.mxu0 0
  %769 = vmatprep.subr.bf16.mxu0 0
  %770 = vmatpush1.bf16.xpose.msra.mxu0 0
  %771 = vmatprep.subr.bf16.mxu0 0
  %772 = vmatpush1.bf16.xpose.msra.mxu0 0
  %773 = vmatprep.subr.bf16.mxu0 0
  %774 = vmatpush1.bf16.xpose.msra.mxu0 0
  %775 = vmatprep.subr.bf16.mxu0 0
  %776 = vmatpush1.bf16.xpose.msra.mxu0 0
  %777 = vmatprep.subr.bf16.mxu0 0
  %778 = vmatpush1.bf16.xpose.msra.mxu0 0
  %779 = vmatprep.subr.bf16.mxu0 0
  %780 = vmatpush1.bf16.xpose.msra.mxu0 0
  %781 = vmatprep.subr.bf16.mxu0 0
  %782 = vmatpush1.bf16.xpose.msra.mxu0 0
  %783 = vmatprep.subr.bf16.mxu0 0
  %784 = vmatpush1.bf16.xpose.msra.mxu0 0
  %785 = vmatprep.subr.bf16.mxu0 0
  %786 = vmatpush1.bf16.xpose.msra.mxu0 0
  %787 = vmatprep.subr.bf16.mxu0 0
  %788 = vmatpush1.bf16.xpose.msra.mxu0 0
  %789 = vmatprep.subr.bf16.mxu0 0
  %790 = vmatpush1.bf16.xpose.msra.mxu0 0
  %791 = vmatprep.subr.bf16.mxu0 0
  %792 = vmatpush1.bf16.xpose.msra.mxu0 0
  %793 = vmatprep.mubr.bf16.mxu0 0
  %794 = vmatmul.mubr.bf16.gmra.mrb[0].mxu0 %v717
  %v795 = vpop.f32.mrb[0].mxu0
  %v796 = vadd.f32 0.0, %v795
  %v797 = vpop.f32.mrb[0].mxu0
  %v798 = vpop.f32.mrb[0].mxu0
  %v799 = vpop.f32.mrb[0].mxu0
  %800 = vdwg.mxu0
  %v801 = vmul.f32 %v796, 14.285714
  %vm802 = vcmask 9216
  %803 = vst.msk [vmem:[%s5 + $0xa] sm:$0x3] %vm802, %v759
  %805 = vrot.lane.b32.xlu0 %v801, 2
  %v806 = vpop.permute.xlu0 %805
  %vm808 = vcmask 25616
  %809 = vst.msk [vmem:[%s5 + $0xa] sm:$0x3] %vm808, %v806
  // Predicated region
  $region22: #{medclip_forward.1} parent=0 // pred_check
    _
  $region23: #{medclip_forward.1} parent=0 // pred_check_branch
    %811 = sbr.rel (0) target = $region25
  $region24: #{medclip_forward.1} parent=0 // pred_region
    _
  $region25: #{medclip_forward.1} parent=0 // pred_fallthru
    _
  // Predicated region
  $region26: #{medclip_forward.1} parent=0 // pred_check
    _
  $region27: #{medclip_forward.1} parent=0 // pred_check_branch
    %813 = sbr.rel (0) target = $region29
  $region28: #{medclip_forward.1} parent=0 // pred_region
    _
  $region29: #{medclip_forward.1} parent=0 // pred_fallthru
    _

</llo_original>
